<compile_context>
chip_gen: v7x
topology: tpu7x:2x2x1
jax: 0.10.0
libtpu: 0.0.40
codegen_flags: <defaults>
</compile_context>

<pallas_src>
import functools

import jax
import jax.numpy as jnp
import numpy as np
from jax import lax
from jax.experimental import pallas as pl
from jax.experimental.pallas import tpu as pltpu


def _round_up(n: int, m: int) -> int:
    return ((n + m - 1) // m) * m


def _rnn_recurrence_kernel(xw_ref, whh_ref, wfc_ref, bfc_ref, out_ref, h_ref):
    """One (batch-block, time-chunk) grid step.

    xw_ref  : (TC, BB, Hp)  precomputed x @ W_ih^T + (b_ih + b_hh), time-major
    whh_ref : (Hp, Hp)      hidden->hidden weight (pre-transposed, zero-padded)
    wfc_ref : (Hp, Op)      fc weight (pre-transposed, zero-padded)
    bfc_ref : (1, Op)       fc bias (zero-padded)
    out_ref : (BB, Op)      fc(h_T) for this batch block (written on last chunk)
    h_ref   : (BB, Hp) f32  hidden state carried across time chunks (VMEM)
    """
    t = pl.program_id(1)              # time-chunk index (inner, "arbitrary")
    nt = pl.num_programs(1)

    @pl.when(t == 0)
    def _():
        h_ref[...] = jnp.zeros_like(h_ref)

    whh = whh_ref[...]                # load once, reuse across unrolled steps
    tc = xw_ref.shape[0]              # static chunk length

    def step(i, h):
        # Only one matmul + tanh on the sequential critical path.
        return jnp.tanh(xw_ref[i]
                        + jnp.dot(h, whh, preferred_element_type=jnp.float32))

    h = lax.fori_loop(0, tc, step, h_ref[...], unroll=True)
    h_ref[...] = h

    @pl.when(t == nt - 1)
    def _():
        out_ref[...] = (jnp.dot(h, wfc_ref[...],
                                preferred_element_type=jnp.float32)
                        + bfc_ref[...]).astype(out_ref.dtype)


@jax.jit
def rnn_model_forward(x, w_ih, w_hh, b_ih, b_hh, w_fc, b_fc):
    """x: (B, T, D) batch_first, like the PyTorch module. Returns (B, outputDim).

    Matches: h_0 = 0; h_t = tanh(x_t W_ih^T + b_ih + h_{t-1} W_hh^T + b_hh);
             out = h_T W_fc^T + b_fc.          (layerNum == 1, as required by
             the original forward's hn.view(batchSize, hiddenNum).)
    """
    f32 = jnp.float32
    B, T, D = x.shape
    H = w_ih.shape[0]                 # (H, D) PyTorch convention
    O = w_fc.shape[0]                 # (O, H)

    LANE, SUB = 128, 8
    Hp = _round_up(H, LANE)
    Op = _round_up(O, LANE)
    BB = min(_round_up(B, SUB), 128)  # batch block (sublane-aligned)
    Bp = _round_up(B, BB)
    nb = Bp // BB

    # Time chunk: bound the streamed xw block to ~2 MiB per buffer.
    tc_cap = max(1, (2 * 1024 * 1024) // (BB * Hp * 4))
    TC = max(1, min(T, tc_cap))
    Tp = _round_up(T, TC)
    nt = Tp // TC

    # --- zero-padded, pre-transposed parameters -----------------------------
    wih_p = jnp.zeros((D, Hp), f32).at[:, :H].set(w_ih.astype(f32).T)
    whh_p = jnp.zeros((Hp, Hp), f32).at[:H, :H].set(w_hh.astype(f32).T)
    b_p = jnp.zeros((Hp,), f32).at[:H].set((b_ih + b_hh).astype(f32))
    wfc_p = jnp.zeros((Hp, Op), f32).at[:H, :O].set(w_fc.astype(f32).T)
    bfc_p = jnp.zeros((1, Op), f32).at[0, :O].set(b_fc.astype(f32))

    # --- hoisted input projection: one big matmul, bias folded in -----------
    x_tm = jnp.transpose(x.astype(f32), (1, 0, 2))            # (T, B, D)
    xw = (jnp.dot(x_tm.reshape(T * B, D), wih_p,
                  preferred_element_type=f32) + b_p).reshape(T, B, Hp)

    # Pad batch (zero rows: sliced away at the end) and LEFT-pad time with
    # zero steps (h0 = 0 and tanh(0 + 0 @ Whh) = 0, so they don't change h_T).
    xw = jnp.pad(xw, ((Tp - T, 0), (0, Bp - B), (0, 0)))       # (Tp, Bp, Hp)

    out = pl.pallas_call(
        _rnn_recurrence_kernel,
        out_shape=jax.ShapeDtypeStruct((Bp, Op), f32),
        grid_spec=pltpu.PrefetchScalarGridSpec(
            num_scalar_prefetch=0,
            grid=(nb, nt),
            in_specs=[
                pl.BlockSpec((TC, BB, Hp), lambda b, t: (t, b, 0)),  # xw chunk
                pl.BlockSpec((Hp, Hp), lambda b, t: (0, 0)),         # W_hh
                pl.BlockSpec((Hp, Op), lambda b, t: (0, 0)),         # W_fc
                pl.BlockSpec((1, Op), lambda b, t: (0, 0)),          # b_fc
            ],
            out_specs=pl.BlockSpec((BB, Op), lambda b, t: (b, 0)),
            scratch_shapes=[pltpu.VMEM((BB, Hp), f32)],
        ),
        compiler_params=pltpu.CompilerParams(
            dimension_semantics=("parallel", "arbitrary")),
    )(xw, whh_p, wfc_p, bfc_p)

    return out[:B, :O]


def _reference_forward(x, w_ih, w_hh, b_ih, b_hh, w_fc, b_fc):
    """Pure-JAX reference matching nn.RNN(batch_first=True, tanh) + nn.Linear."""
    B, T, D = x.shape
    H = w_ih.shape[0]
    h = jnp.zeros((B, H), jnp.float32)
    for t in range(T):
        h = jnp.tanh(x[:, t, :] @ w_ih.T + b_ih + h @ w_hh.T + b_hh)
    return h @ w_fc.T + b_fc


if __name__ == "__main__":
    # Small shapes consistent with the module (layerNum must be 1 for the
    # hn.view(batchSize, hiddenNum) in the original forward to be valid).
    B, T = 2, 8            # batch, seq
    D, H, O = 4, 32, 1     # inputDim, hiddenNum, outputDim

    key = jax.random.PRNGKey(0)
    k = jax.random.split(key, 8)
    scale = 1.0 / np.sqrt(H)

    # Deterministic init (uniform(-1/sqrt(H), 1/sqrt(H)), like PyTorch).
    w_ih = jax.random.uniform(k[0], (H, D), jnp.float32, -scale, scale)
    w_hh = jax.random.uniform(k[1], (H, H), jnp.float32, -scale, scale)
    b_ih = jax.random.uniform(k[2], (H,), jnp.float32, -scale, scale)
    b_hh = jax.random.uniform(k[3], (H,), jnp.float32, -scale, scale)
    w_fc = jax.random.uniform(k[4], (O, H), jnp.float32, -scale, scale)
    b_fc = jax.random.uniform(k[5], (O,), jnp.float32, -scale, scale)

    x = jax.random.normal(k[6], (B, T, D), jnp.float32)

    out = rnn_model_forward(x, w_ih, w_hh, b_ih, b_hh, w_fc, b_fc)
    out = jax.block_until_ready(out)

    ref = _reference_forward(x, w_ih, w_hh, b_ih, b_hh, w_fc, b_fc)
    assert out.shape == (B, O)
    np.testing.assert_allclose(np.asarray(out), np.asarray(ref),
                               rtol=1e-5, atol=2e-5)

    print("KERNEL_OK")
</pallas_src>

<mosaic_0001>
module attributes {stable_mosaic.version = 11 : i64} {
  func.func @_rnn_recurrence_kernel(%arg0: i32, %arg1: i32, %arg2: memref<8x8x128xf32, #tpu.memory_space<vmem>>, %arg3: memref<128x128xf32, #tpu.memory_space<vmem>>, %arg4: memref<128x128xf32, #tpu.memory_space<vmem>>, %arg5: memref<1x128xf32, #tpu.memory_space<vmem>>, %arg6: memref<8x128xf32, #tpu.memory_space<vmem>>, %arg7: memref<8x128xf32, #tpu.memory_space<vmem>>) attributes {dimension_semantics = [#tpu.dimension_semantics<parallel>, #tpu.dimension_semantics<arbitrary>], iteration_bounds = array<i64: 1, 1>, scalar_prefetch = 0 : i64, scratch_operands = 1 : i64, tpu.core_type = #tpu.core_type<tc>, window_params = [{transform_indices = @transform_0, window_bounds = array<i64: 8, 8, 128>}, {pipeline_mode = #tpu.pipeline_mode<synchronous>, transform_indices = @transform_1, window_bounds = array<i64: 128, 128>}, {pipeline_mode = #tpu.pipeline_mode<synchronous>, transform_indices = @transform_2, window_bounds = array<i64: 128, 128>}, {pipeline_mode = #tpu.pipeline_mode<synchronous>, transform_indices = @transform_3, window_bounds = array<i64: 1, 128>}, {transform_indices = @transform_4, window_bounds = array<i64: 8, 128>}]} {
    %c0_i32 = arith.constant 0 : i32
    %0 = arith.cmpi eq, %arg1, %c0_i32 : i32
    %1 = arith.extui %0 : i1 to i32
    %c0_i32_0 = arith.constant 0 : i32
    %2 = arith.cmpi ne, %1, %c0_i32_0 : i32
    scf.if %2 {
      %cst_32 = arith.constant 0.000000e+00 : f32
      %57 = vector.broadcast %cst_32 : f32 to vector<8x128xf32>
      %c0_33 = arith.constant 0 : index
      %c0_34 = arith.constant 0 : index
      %58 = vector.load %arg7[%c0_33, %c0_34] : memref<8x128xf32, #tpu.memory_space<vmem>>, vector<8x128xf32>
      tpu.vector_store %arg7[%c0_33, %c0_34], %57 {strides = array<i32>} : memref<8x128xf32, #tpu.memory_space<vmem>>, vector<8x128xf32>,
    } else {
    }
    %c0 = arith.constant 0 : index
    %c0_1 = arith.constant 0 : index
    %3 = vector.load %arg3[%c0, %c0_1] : memref<128x128xf32, #tpu.memory_space<vmem>>, vector<128x128xf32>
    %c0_2 = arith.constant 0 : index
    %c0_3 = arith.constant 0 : index
    %4 = vector.load %arg7[%c0_2, %c0_3] : memref<8x128xf32, #tpu.memory_space<vmem>>, vector<8x128xf32>
    %c0_i32_4 = arith.constant 0 : i32
    %5 = arith.index_cast %c0_i32_4 : i32 to index
    %c0_5 = arith.constant 0 : index
    %c0_6 = arith.constant 0 : index
    %6 = vector.load %arg2[%5, %c0_5, %c0_6] : memref<8x8x128xf32, #tpu.memory_space<vmem>>, vector<1x8x128xf32>
    %7 = vector.shape_cast %6 : vector<1x8x128xf32> to vector<8x128xf32>
    %cst = arith.constant dense<0.000000e+00> : vector<8x128xf32>
    %8 = tpu.matmul %4, %3, %cst {dimension_numbers = #tpu.dot_dimension_numbers<[1], [0], [0], [1], [0, 0, 1, 1], [], []>} : vector<8x128xf32>, vector<128x128xf32>, vector<8x128xf32> -> vector<8x128xf32>
    %9 = arith.addf %7, %8 : vector<8x128xf32>
    %10 = math.tanh %9 : vector<8x128xf32>
    %c1_i32 = arith.constant 1 : i32
    %11 = arith.index_cast %c1_i32 : i32 to index
    %c0_7 = arith.constant 0 : index
    %c0_8 = arith.constant 0 : index
    %12 = vector.load %arg2[%11, %c0_7, %c0_8] : memref<8x8x128xf32, #tpu.memory_space<vmem>>, vector<1x8x128xf32>
    %13 = vector.shape_cast %12 : vector<1x8x128xf32> to vector<8x128xf32>
    %cst_9 = arith.constant dense<0.000000e+00> : vector<8x128xf32>
    %14 = tpu.matmul %10, %3, %cst_9 {dimension_numbers = #tpu.dot_dimension_numbers<[1], [0], [0], [1], [0, 0, 1, 1], [], []>} : vector<8x128xf32>, vector<128x128xf32>, vector<8x128xf32> -> vector<8x128xf32>
    %15 = arith.addf %13, %14 : vector<8x128xf32>
    %16 = math.tanh %15 : vector<8x128xf32>
    %c2_i32 = arith.constant 2 : i32
    %17 = arith.index_cast %c2_i32 : i32 to index
    %c0_10 = arith.constant 0 : index
    %c0_11 = arith.constant 0 : index
    %18 = vector.load %arg2[%17, %c0_10, %c0_11] : memref<8x8x128xf32, #tpu.memory_space<vmem>>, vector<1x8x128xf32>
    %19 = vector.shape_cast %18 : vector<1x8x128xf32> to vector<8x128xf32>
    %cst_12 = arith.constant dense<0.000000e+00> : vector<8x128xf32>
    %20 = tpu.matmul %16, %3, %cst_12 {dimension_numbers = #tpu.dot_dimension_numbers<[1], [0], [0], [1], [0, 0, 1, 1], [], []>} : vector<8x128xf32>, vector<128x128xf32>, vector<8x128xf32> -> vector<8x128xf32>
    %21 = arith.addf %19, %20 : vector<8x128xf32>
    %22 = math.tanh %21 : vector<8x128xf32>
    %c3_i32 = arith.constant 3 : i32
    %23 = arith.index_cast %c3_i32 : i32 to index
    %c0_13 = arith.constant 0 : index
    %c0_14 = arith.constant 0 : index
    %24 = vector.load %arg2[%23, %c0_13, %c0_14] : memref<8x8x128xf32, #tpu.memory_space<vmem>>, vector<1x8x128xf32>
    %25 = vector.shape_cast %24 : vector<1x8x128xf32> to vector<8x128xf32>
    %cst_15 = arith.constant dense<0.000000e+00> : vector<8x128xf32>
    %26 = tpu.matmul %22, %3, %cst_15 {dimension_numbers = #tpu.dot_dimension_numbers<[1], [0], [0], [1], [0, 0, 1, 1], [], []>} : vector<8x128xf32>, vector<128x128xf32>, vector<8x128xf32> -> vector<8x128xf32>
    %27 = arith.addf %25, %26 : vector<8x128xf32>
    %28 = math.tanh %27 : vector<8x128xf32>
    %c4_i32 = arith.constant 4 : i32
    %29 = arith.index_cast %c4_i32 : i32 to index
    %c0_16 = arith.constant 0 : index
    %c0_17 = arith.constant 0 : index
    %30 = vector.load %arg2[%29, %c0_16, %c0_17] : memref<8x8x128xf32, #tpu.memory_space<vmem>>, vector<1x8x128xf32>
    %31 = vector.shape_cast %30 : vector<1x8x128xf32> to vector<8x128xf32>
    %cst_18 = arith.constant dense<0.000000e+00> : vector<8x128xf32>
    %32 = tpu.matmul %28, %3, %cst_18 {dimension_numbers = #tpu.dot_dimension_numbers<[1], [0], [0], [1], [0, 0, 1, 1], [], []>} : vector<8x128xf32>, vector<128x128xf32>, vector<8x128xf32> -> vector<8x128xf32>
    %33 = arith.addf %31, %32 : vector<8x128xf32>
    %34 = math.tanh %33 : vector<8x128xf32>
    %c5_i32 = arith.constant 5 : i32
    %35 = arith.index_cast %c5_i32 : i32 to index
    %c0_19 = arith.constant 0 : index
    %c0_20 = arith.constant 0 : index
    %36 = vector.load %arg2[%35, %c0_19, %c0_20] : memref<8x8x128xf32, #tpu.memory_space<vmem>>, vector<1x8x128xf32>
    %37 = vector.shape_cast %36 : vector<1x8x128xf32> to vector<8x128xf32>
    %cst_21 = arith.constant dense<0.000000e+00> : vector<8x128xf32>
    %38 = tpu.matmul %34, %3, %cst_21 {dimension_numbers = #tpu.dot_dimension_numbers<[1], [0], [0], [1], [0, 0, 1, 1], [], []>} : vector<8x128xf32>, vector<128x128xf32>, vector<8x128xf32> -> vector<8x128xf32>
    %39 = arith.addf %37, %38 : vector<8x128xf32>
    %40 = math.tanh %39 : vector<8x128xf32>
    %c6_i32 = arith.constant 6 : i32
    %41 = arith.index_cast %c6_i32 : i32 to index
    %c0_22 = arith.constant 0 : index
    %c0_23 = arith.constant 0 : index
    %42 = vector.load %arg2[%41, %c0_22, %c0_23] : memref<8x8x128xf32, #tpu.memory_space<vmem>>, vector<1x8x128xf32>
    %43 = vector.shape_cast %42 : vector<1x8x128xf32> to vector<8x128xf32>
    %cst_24 = arith.constant dense<0.000000e+00> : vector<8x128xf32>
    %44 = tpu.matmul %40, %3, %cst_24 {dimension_numbers = #tpu.dot_dimension_numbers<[1], [0], [0], [1], [0, 0, 1, 1], [], []>} : vector<8x128xf32>, vector<128x128xf32>, vector<8x128xf32> -> vector<8x128xf32>
    %45 = arith.addf %43, %44 : vector<8x128xf32>
    %46 = math.tanh %45 : vector<8x128xf32>
    %c7_i32 = arith.constant 7 : i32
    %47 = arith.index_cast %c7_i32 : i32 to index
    %c0_25 = arith.constant 0 : index
    %c0_26 = arith.constant 0 : index
    %48 = vector.load %arg2[%47, %c0_25, %c0_26] : memref<8x8x128xf32, #tpu.memory_space<vmem>>, vector<1x8x128xf32>
    %49 = vector.shape_cast %48 : vector<1x8x128xf32> to vector<8x128xf32>
    %cst_27 = arith.constant dense<0.000000e+00> : vector<8x128xf32>
    %50 = tpu.matmul %46, %3, %cst_27 {dimension_numbers = #tpu.dot_dimension_numbers<[1], [0], [0], [1], [0, 0, 1, 1], [], []>} : vector<8x128xf32>, vector<128x128xf32>, vector<8x128xf32> -> vector<8x128xf32>
    %51 = arith.addf %49, %50 : vector<8x128xf32>
    %52 = math.tanh %51 : vector<8x128xf32>
    %c8_i32 = arith.constant 8 : i32
    %c0_28 = arith.constant 0 : index
    %c0_29 = arith.constant 0 : index
    %53 = vector.load %arg7[%c0_28, %c0_29] : memref<8x128xf32, #tpu.memory_space<vmem>>, vector<8x128xf32>
    tpu.vector_store %arg7[%c0_28, %c0_29], %52 {strides = array<i32>} : memref<8x128xf32, #tpu.memory_space<vmem>>, vector<8x128xf32>,
    %c0_i32_30 = arith.constant 0 : i32
    %54 = arith.cmpi eq, %arg1, %c0_i32_30 : i32
    %55 = arith.extui %54 : i1 to i32
    %c0_i32_31 = arith.constant 0 : i32
    %56 = arith.cmpi ne, %55, %c0_i32_31 : i32
    scf.if %56 {
      %c0_32 = arith.constant 0 : index
      %c0_33 = arith.constant 0 : index
      %57 = vector.load %arg4[%c0_32, %c0_33] : memref<128x128xf32, #tpu.memory_space<vmem>>, vector<128x128xf32>
      %cst_34 = arith.constant dense<0.000000e+00> : vector<8x128xf32>
      %58 = tpu.matmul %52, %57, %cst_34 {dimension_numbers = #tpu.dot_dimension_numbers<[1], [0], [0], [1], [0, 0, 1, 1], [], []>} : vector<8x128xf32>, vector<128x128xf32>, vector<8x128xf32> -> vector<8x128xf32>
      %c0_35 = arith.constant 0 : index
      %c0_36 = arith.constant 0 : index
      %59 = vector.load %arg5[%c0_35, %c0_36] : memref<1x128xf32, #tpu.memory_space<vmem>>, vector<1x128xf32>
      %60 = vector.broadcast %59 : vector<1x128xf32> to vector<8x128xf32>
      %61 = arith.addf %58, %60 : vector<8x128xf32>
      %c0_37 = arith.constant 0 : index
      %c0_38 = arith.constant 0 : index
      %62 = vector.load %arg6[%c0_37, %c0_38] : memref<8x128xf32, #tpu.memory_space<vmem>>, vector<8x128xf32>
      tpu.vector_store %arg6[%c0_37, %c0_38], %61 {strides = array<i32>} : memref<8x128xf32, #tpu.memory_space<vmem>>, vector<8x128xf32>,
    } else {
    }
    return
  }
  func.func @transform_0(%arg0: i32, %arg1: i32) -> (i32, i32, i32) {
    %c0_i32 = arith.constant 0 : i32
    %c0_i32_0 = arith.constant 0 : i32
    return %arg1, %arg0, %c0_i32 : i32, i32, i32
  }
  func.func @transform_1(%arg0: i32, %arg1: i32) -> (i32, i32) {
    %c0_i32 = arith.constant 0 : i32
    %c0_i32_0 = arith.constant 0 : i32
    %c0_i32_1 = arith.constant 0 : i32
    return %c0_i32, %c0_i32_0 : i32, i32
  }
  func.func @transform_2(%arg0: i32, %arg1: i32) -> (i32, i32) {
    %c0_i32 = arith.constant 0 : i32
    %c0_i32_0 = arith.constant 0 : i32
    %c0_i32_1 = arith.constant 0 : i32
    return %c0_i32, %c0_i32_0 : i32, i32
  }
  func.func @transform_3(%arg0: i32, %arg1: i32) -> (i32, i32) {
    %c0_i32 = arith.constant 0 : i32
    %c0_i32_0 = arith.constant 0 : i32
    %c0_i32_1 = arith.constant 0 : i32
    return %c0_i32, %c0_i32_0 : i32, i32
  }
  func.func @transform_4(%arg0: i32, %arg1: i32) -> (i32, i32) {
    %c0_i32 = arith.constant 0 : i32
    %c0_i32_0 = arith.constant 0 : i32
    return %arg0, %c0_i32 : i32, i32
  }
}

</mosaic_0001>

<llo_original>
// kernel: rnn_model_forward.1
$region0: #{rnn_model_forward.1}
  #allocation0 [shape = 'u32[]', space=smem, size = 0x4, offset = 0x4, fixed_abs, tag = 'smem constant byte address 0x4 - core index']
  #allocation1 [shape = 'u32[144,128]{1,0:T(1,128)}', space=vmem, size = 0x12000, scoped, tag = 'internal scratch']
  #allocation2 [shape = 'f32[8,128]{1,0:T(8,128)}', space=vmem, size = 0x1000, scoped, tag = 'scratch operand']
  %s0 = inlined_call_operand.vmem [shape: f32[8,8,128], index: 0, kind: input, shape index: {}]
  %s1 = inlined_call_operand.vmem [shape: f32[128,128], index: 1, kind: input, shape index: {}]
  %s2 = inlined_call_operand.vmem [shape: f32[128,128], index: 2, kind: input, shape index: {}]
  %s3 = inlined_call_operand.vmem [shape: f32[1,128], index: 3, kind: input, shape index: {}]
  %s4 = inlined_call_operand.vmem [shape: f32[8,128], index: 4, kind: output, shape index: {}]
  %s5 = sld [smem:[#allocation0]]
  $region34: #{rnn_model_forward.1} parent=0
    _
  %s7 = ssub.s32 1, %s5
  %s8 = scalar_select 0, %s7, %s5
  // Predicated region
  $region2: #{rnn_model_forward.1} parent=0 // pred_check
    _
  $region3: #{rnn_model_forward.1} parent=0 // pred_check_branch
    %10 = sbr.rel (0) target = $region5
  $region4: #{rnn_model_forward.1} parent=0 // pred_region
    _
  $region5: #{rnn_model_forward.1} parent=0 // pred_fallthru
    _
  // Predicated region
  $region6: #{rnn_model_forward.1} parent=0 // pred_check
    _
  $region7: #{rnn_model_forward.1} parent=0 // pred_check_branch
    %12 = sbr.rel (0) target = $region9
  $region8: #{rnn_model_forward.1} parent=0 // pred_region
    _
  $region9: #{rnn_model_forward.1} parent=0 // pred_fallthru
    _
  // Predicated region
  $region10: #{rnn_model_forward.1} parent=0 // pred_check
    _
  $region11: #{rnn_model_forward.1} parent=0 // pred_check_branch
    %14 = sbr.rel (0) target = $region13
  $region12: #{rnn_model_forward.1} parent=0 // pred_region
    _
  $region13: #{rnn_model_forward.1} parent=0 // pred_fallthru
    _
  // Predicated region
  $region14: #{rnn_model_forward.1} parent=0 // pred_check
    _
  $region15: #{rnn_model_forward.1} parent=0 // pred_check_branch
    %16 = sbr.rel (0) target = $region17
  $region16: #{rnn_model_forward.1} parent=0 // pred_region
    _
  $region17: #{rnn_model_forward.1} parent=0 // pred_fallthru
    _
  %p17 = scmp.eq.s32.totalorder 0, 0
  // Predicated region
  $region18: #{rnn_model_forward.1} parent=0 // pred_check
    %p18 = pneg %p17
  $region19: #{rnn_model_forward.1} parent=0 // pred_check_branch
    %20 = sbr.rel (%p18) target = $region21
  $region20: #{rnn_model_forward.1} parent=0 // pred_region
    %21 = vst [vmem:[#allocation2] sm:$0xff] 0.0
  $region21: #{rnn_model_forward.1} parent=0 // pred_fallthru
    _
  %v22 = vld [vmem:[%s1] sm:$0xff]
  %v23 = vld [vmem:[%s1 + $0x8] sm:$0xff]
  %v24 = vld [vmem:[%s1 + $0x10] sm:$0xff]
  %v25 = vld [vmem:[%s1 + $0x18] sm:$0xff]
  %v26 = vld [vmem:[%s1 + $0x20] sm:$0xff]
  %v27 = vld [vmem:[%s1 + $0x28] sm:$0xff]
  %v28 = vld [vmem:[%s1 + $0x30] sm:$0xff]
  %v29 = vld [vmem:[%s1 + $0x38] sm:$0xff]
  %v30 = vld [vmem:[%s1 + $0x40] sm:$0xff]
  %v31 = vld [vmem:[%s1 + $0x48] sm:$0xff]
  %v32 = vld [vmem:[%s1 + $0x50] sm:$0xff]
  %v33 = vld [vmem:[%s1 + $0x58] sm:$0xff]
  %v34 = vld [vmem:[%s1 + $0x60] sm:$0xff]
  %v35 = vld [vmem:[%s1 + $0x68] sm:$0xff]
  %v36 = vld [vmem:[%s1 + $0x70] sm:$0xff]
  %v37 = vld [vmem:[%s1 + $0x78] sm:$0xff]
  %v38 = vld [vmem:[#allocation2] sm:$0xff]
  %v39 = vld [vmem:[%s0] sm:$0xff]
  %40 = vmatprep.subr.mxu0 0.0
  %41 = vmatpush1.msra.mxu0 %v22
  %42 = vmatprep.subr.mxu0 0.0
  %43 = vmatpush1.msra.mxu0 %v23
  %44 = vmatprep.subr.mxu0 0.0
  %45 = vmatpush1.msra.mxu0 %v24
  %46 = vmatprep.subr.mxu0 0.0
  %47 = vmatpush1.msra.mxu0 %v25
  %48 = vmatprep.subr.mxu0 0.0
  %49 = vmatpush1.msra.mxu0 %v26
  %50 = vmatprep.subr.mxu0 0.0
  %51 = vmatpush1.msra.mxu0 %v27
  %52 = vmatprep.subr.mxu0 0.0
  %53 = vmatpush1.msra.mxu0 %v28
  %54 = vmatprep.subr.mxu0 0.0
  %55 = vmatpush1.msra.mxu0 %v29
  %56 = vmatprep.subr.mxu0 0.0
  %57 = vmatpush1.msra.mxu0 %v30
  %58 = vmatprep.subr.mxu0 0.0
  %59 = vmatpush1.msra.mxu0 %v31
  %60 = vmatprep.subr.mxu0 0.0
  %61 = vmatpush1.msra.mxu0 %v32
  %62 = vmatprep.subr.mxu0 0.0
  %63 = vmatpush1.msra.mxu0 %v33
  %64 = vmatprep.subr.mxu0 0.0
  %65 = vmatpush1.msra.mxu0 %v34
  %66 = vmatprep.subr.mxu0 0.0
  %67 = vmatpush1.msra.mxu0 %v35
  %68 = vmatprep.subr.mxu0 0.0
  %69 = vmatpush1.msra.mxu0 %v36
  %70 = vmatprep.subr.mxu0 0.0
  %71 = vmatpush1.msra.mxu0 %v37
  %72 = vmatprep.subr.mxu0 0.0
  %73 = vmatpush1.msra.mxu0 0.0
  %74 = vmatprep.subr.mxu0 0.0
  %75 = vmatpush1.msra.mxu0 0.0
  %76 = vmatprep.subr.mxu0 0.0
  %77 = vmatpush1.msra.mxu0 0.0
  %78 = vmatprep.subr.mxu0 0.0
  %79 = vmatpush1.msra.mxu0 0.0
  %80 = vmatprep.subr.mxu0 0.0
  %81 = vmatpush1.msra.mxu0 0.0
  %82 = vmatprep.subr.mxu0 0.0
  %83 = vmatpush1.msra.mxu0 0.0
  %84 = vmatprep.subr.mxu0 0.0
  %85 = vmatpush1.msra.mxu0 0.0
  %86 = vmatprep.subr.mxu0 0.0
  %87 = vmatpush1.msra.mxu0 0.0
  %88 = vmatprep.subr.mxu0 0.0
  %89 = vmatpush1.msra.mxu0 0.0
  %90 = vmatprep.subr.mxu0 0.0
  %91 = vmatpush1.msra.mxu0 0.0
  %92 = vmatprep.subr.mxu0 0.0
  %93 = vmatpush1.msra.mxu0 0.0
  %94 = vmatprep.subr.mxu0 0.0
  %95 = vmatpush1.msra.mxu0 0.0
  %96 = vmatprep.subr.mxu0 0.0
  %97 = vmatpush1.msra.mxu0 0.0
  %98 = vmatprep.subr.mxu0 0.0
  %99 = vmatpush1.msra.mxu0 0.0
  %100 = vmatprep.subr.mxu0 0.0
  %101 = vmatpush1.msra.mxu0 0.0
  %102 = vmatprep.subr.mxu0 0.0
  %103 = vmatpush1.msra.mxu0 0.0
  %104 = vmatprep.mubr.f32.mxu0 0.0
  %105 = vmatmul.mubr.f32.gmra.mrb[0].mxu0 %v38
  %v106 = vpop.f32.mrb[0].mxu0
  %v107 = vadd.f32 0.0, %v106
  %v108 = vpop.f32.mrb[0].mxu0
  %109 = vdwg.mxu0
  %v110 = vadd.f32 %v39, %v107
  %v111 = vtanh.pop %v110
  %s112 = scalar_lea.vmem %s0, 8
  %v113 = vld [vmem:[%s112] sm:$0xff]
  %114 = vmatprep.subr.mxu0 0.0
  %115 = vmatpush1.msra.mxu0 %v22
  %116 = vmatprep.subr.mxu0 0.0
  %117 = vmatpush1.msra.mxu0 %v23
  %118 = vmatprep.subr.mxu0 0.0
  %119 = vmatpush1.msra.mxu0 %v24
  %120 = vmatprep.subr.mxu0 0.0
  %121 = vmatpush1.msra.mxu0 %v25
  %122 = vmatprep.subr.mxu0 0.0
  %123 = vmatpush1.msra.mxu0 %v26
  %124 = vmatprep.subr.mxu0 0.0
  %125 = vmatpush1.msra.mxu0 %v27
  %126 = vmatprep.subr.mxu0 0.0
  %127 = vmatpush1.msra.mxu0 %v28
  %128 = vmatprep.subr.mxu0 0.0
  %129 = vmatpush1.msra.mxu0 %v29
  %130 = vmatprep.subr.mxu0 0.0
  %131 = vmatpush1.msra.mxu0 %v30
  %132 = vmatprep.subr.mxu0 0.0
  %133 = vmatpush1.msra.mxu0 %v31
  %134 = vmatprep.subr.mxu0 0.0
  %135 = vmatpush1.msra.mxu0 %v32
  %136 = vmatprep.subr.mxu0 0.0
  %137 = vmatpush1.msra.mxu0 %v33
  %138 = vmatprep.subr.mxu0 0.0
  %139 = vmatpush1.msra.mxu0 %v34
  %140 = vmatprep.subr.mxu0 0.0
  %141 = vmatpush1.msra.mxu0 %v35
  %142 = vmatprep.subr.mxu0 0.0
  %143 = vmatpush1.msra.mxu0 %v36
  %144 = vmatprep.subr.mxu0 0.0
  %145 = vmatpush1.msra.mxu0 %v37
  %146 = vmatprep.subr.mxu0 0.0
  %147 = vmatpush1.msra.mxu0 0.0
  %148 = vmatprep.subr.mxu0 0.0
  %149 = vmatpush1.msra.mxu0 0.0
  %150 = vmatprep.subr.mxu0 0.0
  %151 = vmatpush1.msra.mxu0 0.0
  %152 = vmatprep.subr.mxu0 0.0
  %153 = vmatpush1.msra.mxu0 0.0
  %154 = vmatprep.subr.mxu0 0.0
  %155 = vmatpush1.msra.mxu0 0.0
  %156 = vmatprep.subr.mxu0 0.0
  %157 = vmatpush1.msra.mxu0 0.0
  %158 = vmatprep.subr.mxu0 0.0
  %159 = vmatpush1.msra.mxu0 0.0
  %160 = vmatprep.subr.mxu0 0.0
  %161 = vmatpush1.msra.mxu0 0.0
  %162 = vmatprep.subr.mxu0 0.0
  %163 = vmatpush1.msra.mxu0 0.0
  %164 = vmatprep.subr.mxu0 0.0
  %165 = vmatpush1.msra.mxu0 0.0
  %166 = vmatprep.subr.mxu0 0.0
  %167 = vmatpush1.msra.mxu0 0.0
  %168 = vmatprep.subr.mxu0 0.0
  %169 = vmatpush1.msra.mxu0 0.0
  %170 = vmatprep.subr.mxu0 0.0
  %171 = vmatpush1.msra.mxu0 0.0
  %172 = vmatprep.subr.mxu0 0.0
  %173 = vmatpush1.msra.mxu0 0.0
  %174 = vmatprep.subr.mxu0 0.0
  %175 = vmatpush1.msra.mxu0 0.0
  %176 = vmatprep.subr.mxu0 0.0
  %177 = vmatpush1.msra.mxu0 0.0
  %178 = vmatprep.mubr.f32.mxu0 0.0
  %179 = vmatmul.mubr.f32.gmra.mrb[0].mxu0 %v111
  %v180 = vpop.f32.mrb[0].mxu0
  %v181 = vadd.f32 0.0, %v180
  %v182 = vpop.f32.mrb[0].mxu0
  %183 = vdwg.mxu0
  %v184 = vadd.f32 %v113, %v181
  %v185 = vtanh.pop %v184
  %s186 = scalar_lea.vmem %s0, 16
  %v187 = vld [vmem:[%s186] sm:$0xff]
  %188 = vmatprep.subr.mxu0 0.0
  %189 = vmatpush1.msra.mxu0 %v22
  %190 = vmatprep.subr.mxu0 0.0
  %191 = vmatpush1.msra.mxu0 %v23
  %192 = vmatprep.subr.mxu0 0.0
  %193 = vmatpush1.msra.mxu0 %v24
  %194 = vmatprep.subr.mxu0 0.0
  %195 = vmatpush1.msra.mxu0 %v25
  %196 = vmatprep.subr.mxu0 0.0
  %197 = vmatpush1.msra.mxu0 %v26
  %198 = vmatprep.subr.mxu0 0.0
  %199 = vmatpush1.msra.mxu0 %v27
  %200 = vmatprep.subr.mxu0 0.0
  %201 = vmatpush1.msra.mxu0 %v28
  %202 = vmatprep.subr.mxu0 0.0
  %203 = vmatpush1.msra.mxu0 %v29
  %204 = vmatprep.subr.mxu0 0.0
  %205 = vmatpush1.msra.mxu0 %v30
  %206 = vmatprep.subr.mxu0 0.0
  %207 = vmatpush1.msra.mxu0 %v31
  %208 = vmatprep.subr.mxu0 0.0
  %209 = vmatpush1.msra.mxu0 %v32
  %210 = vmatprep.subr.mxu0 0.0
  %211 = vmatpush1.msra.mxu0 %v33
  %212 = vmatprep.subr.mxu0 0.0
  %213 = vmatpush1.msra.mxu0 %v34
  %214 = vmatprep.subr.mxu0 0.0
  %215 = vmatpush1.msra.mxu0 %v35
  %216 = vmatprep.subr.mxu0 0.0
  %217 = vmatpush1.msra.mxu0 %v36
  %218 = vmatprep.subr.mxu0 0.0
  %219 = vmatpush1.msra.mxu0 %v37
  %220 = vmatprep.subr.mxu0 0.0
  %221 = vmatpush1.msra.mxu0 0.0
  %222 = vmatprep.subr.mxu0 0.0
  %223 = vmatpush1.msra.mxu0 0.0
  %224 = vmatprep.subr.mxu0 0.0
  %225 = vmatpush1.msra.mxu0 0.0
  %226 = vmatprep.subr.mxu0 0.0
  %227 = vmatpush1.msra.mxu0 0.0
  %228 = vmatprep.subr.mxu0 0.0
  %229 = vmatpush1.msra.mxu0 0.0
  %230 = vmatprep.subr.mxu0 0.0
  %231 = vmatpush1.msra.mxu0 0.0
  %232 = vmatprep.subr.mxu0 0.0
  %233 = vmatpush1.msra.mxu0 0.0
  %234 = vmatprep.subr.mxu0 0.0
  %235 = vmatpush1.msra.mxu0 0.0
  %236 = vmatprep.subr.mxu0 0.0
  %237 = vmatpush1.msra.mxu0 0.0
  %238 = vmatprep.subr.mxu0 0.0
  %239 = vmatpush1.msra.mxu0 0.0
  %240 = vmatprep.subr.mxu0 0.0
  %241 = vmatpush1.msra.mxu0 0.0
  %242 = vmatprep.subr.mxu0 0.0
  %243 = vmatpush1.msra.mxu0 0.0
  %244 = vmatprep.subr.mxu0 0.0
  %245 = vmatpush1.msra.mxu0 0.0
  %246 = vmatprep.subr.mxu0 0.0
  %247 = vmatpush1.msra.mxu0 0.0
  %248 = vmatprep.subr.mxu0 0.0
  %249 = vmatpush1.msra.mxu0 0.0
  %250 = vmatprep.subr.mxu0 0.0
  %251 = vmatpush1.msra.mxu0 0.0
  %252 = vmatprep.mubr.f32.mxu0 0.0
  %253 = vmatmul.mubr.f32.gmra.mrb[0].mxu0 %v185
  %v254 = vpop.f32.mrb[0].mxu0
  %v255 = vadd.f32 0.0, %v254
  %v256 = vpop.f32.mrb[0].mxu0
  %257 = vdwg.mxu0
  %v258 = vadd.f32 %v187, %v255
  %v259 = vtanh.pop %v258
  %s260 = scalar_lea.vmem %s0, 24
  %v261 = vld [vmem:[%s260] sm:$0xff]
  %262 = vmatprep.subr.mxu0 0.0
  %263 = vmatpush1.msra.mxu0 %v22
  %264 = vmatprep.subr.mxu0 0.0
  %265 = vmatpush1.msra.mxu0 %v23
  %266 = vmatprep.subr.mxu0 0.0
  %267 = vmatpush1.msra.mxu0 %v24
  %268 = vmatprep.subr.mxu0 0.0
  %269 = vmatpush1.msra.mxu0 %v25
  %270 = vmatprep.subr.mxu0 0.0
  %271 = vmatpush1.msra.mxu0 %v26
  %272 = vmatprep.subr.mxu0 0.0
  %273 = vmatpush1.msra.mxu0 %v27
  %274 = vmatprep.subr.mxu0 0.0
  %275 = vmatpush1.msra.mxu0 %v28
  %276 = vmatprep.subr.mxu0 0.0
  %277 = vmatpush1.msra.mxu0 %v29
  %278 = vmatprep.subr.mxu0 0.0
  %279 = vmatpush1.msra.mxu0 %v30
  %280 = vmatprep.subr.mxu0 0.0
  %281 = vmatpush1.msra.mxu0 %v31
  %282 = vmatprep.subr.mxu0 0.0
  %283 = vmatpush1.msra.mxu0 %v32
  %284 = vmatprep.subr.mxu0 0.0
  %285 = vmatpush1.msra.mxu0 %v33
  %286 = vmatprep.subr.mxu0 0.0
  %287 = vmatpush1.msra.mxu0 %v34
  %288 = vmatprep.subr.mxu0 0.0
  %289 = vmatpush1.msra.mxu0 %v35
  %290 = vmatprep.subr.mxu0 0.0
  %291 = vmatpush1.msra.mxu0 %v36
  %292 = vmatprep.subr.mxu0 0.0
  %293 = vmatpush1.msra.mxu0 %v37
  %294 = vmatprep.subr.mxu0 0.0
  %295 = vmatpush1.msra.mxu0 0.0
  %296 = vmatprep.subr.mxu0 0.0
  %297 = vmatpush1.msra.mxu0 0.0
  %298 = vmatprep.subr.mxu0 0.0
  %299 = vmatpush1.msra.mxu0 0.0
  %300 = vmatprep.subr.mxu0 0.0
  %301 = vmatpush1.msra.mxu0 0.0
  %302 = vmatprep.subr.mxu0 0.0
  %303 = vmatpush1.msra.mxu0 0.0
  %304 = vmatprep.subr.mxu0 0.0
  %305 = vmatpush1.msra.mxu0 0.0
  %306 = vmatprep.subr.mxu0 0.0
  %307 = vmatpush1.msra.mxu0 0.0
  %308 = vmatprep.subr.mxu0 0.0
  %309 = vmatpush1.msra.mxu0 0.0
  %310 = vmatprep.subr.mxu0 0.0
  %311 = vmatpush1.msra.mxu0 0.0
  %312 = vmatprep.subr.mxu0 0.0
  %313 = vmatpush1.msra.mxu0 0.0
  %314 = vmatprep.subr.mxu0 0.0
  %315 = vmatpush1.msra.mxu0 0.0
  %316 = vmatprep.subr.mxu0 0.0
  %317 = vmatpush1.msra.mxu0 0.0
  %318 = vmatprep.subr.mxu0 0.0
  %319 = vmatpush1.msra.mxu0 0.0
  %320 = vmatprep.subr.mxu0 0.0
  %321 = vmatpush1.msra.mxu0 0.0
  %322 = vmatprep.subr.mxu0 0.0
  %323 = vmatpush1.msra.mxu0 0.0
  %324 = vmatprep.subr.mxu0 0.0
  %325 = vmatpush1.msra.mxu0 0.0
  %326 = vmatprep.mubr.f32.mxu0 0.0
  %327 = vmatmul.mubr.f32.gmra.mrb[0].mxu0 %v259
  %v328 = vpop.f32.mrb[0].mxu0
  %v329 = vadd.f32 0.0, %v328
  %v330 = vpop.f32.mrb[0].mxu0
  %331 = vdwg.mxu0
  %v332 = vadd.f32 %v261, %v329
  %v333 = vtanh.pop %v332
  %s334 = scalar_lea.vmem %s0, 32
  %v335 = vld [vmem:[%s334] sm:$0xff]
  %336 = vmatprep.subr.mxu0 0.0
  %337 = vmatpush1.msra.mxu0 %v22
  %338 = vmatprep.subr.mxu0 0.0
  %339 = vmatpush1.msra.mxu0 %v23
  %340 = vmatprep.subr.mxu0 0.0
  %341 = vmatpush1.msra.mxu0 %v24
  %342 = vmatprep.subr.mxu0 0.0
  %343 = vmatpush1.msra.mxu0 %v25
  %344 = vmatprep.subr.mxu0 0.0
  %345 = vmatpush1.msra.mxu0 %v26
  %346 = vmatprep.subr.mxu0 0.0
  %347 = vmatpush1.msra.mxu0 %v27
  %348 = vmatprep.subr.mxu0 0.0
  %349 = vmatpush1.msra.mxu0 %v28
  %350 = vmatprep.subr.mxu0 0.0
  %351 = vmatpush1.msra.mxu0 %v29
  %352 = vmatprep.subr.mxu0 0.0
  %353 = vmatpush1.msra.mxu0 %v30
  %354 = vmatprep.subr.mxu0 0.0
  %355 = vmatpush1.msra.mxu0 %v31
  %356 = vmatprep.subr.mxu0 0.0
  %357 = vmatpush1.msra.mxu0 %v32
  %358 = vmatprep.subr.mxu0 0.0
  %359 = vmatpush1.msra.mxu0 %v33
  %360 = vmatprep.subr.mxu0 0.0
  %361 = vmatpush1.msra.mxu0 %v34
  %362 = vmatprep.subr.mxu0 0.0
  %363 = vmatpush1.msra.mxu0 %v35
  %364 = vmatprep.subr.mxu0 0.0
  %365 = vmatpush1.msra.mxu0 %v36
  %366 = vmatprep.subr.mxu0 0.0
  %367 = vmatpush1.msra.mxu0 %v37
  %368 = vmatprep.subr.mxu0 0.0
  %369 = vmatpush1.msra.mxu0 0.0
  %370 = vmatprep.subr.mxu0 0.0
  %371 = vmatpush1.msra.mxu0 0.0
  %372 = vmatprep.subr.mxu0 0.0
  %373 = vmatpush1.msra.mxu0 0.0
  %374 = vmatprep.subr.mxu0 0.0
  %375 = vmatpush1.msra.mxu0 0.0
  %376 = vmatprep.subr.mxu0 0.0
  %377 = vmatpush1.msra.mxu0 0.0
  %378 = vmatprep.subr.mxu0 0.0
  %379 = vmatpush1.msra.mxu0 0.0
  %380 = vmatprep.subr.mxu0 0.0
  %381 = vmatpush1.msra.mxu0 0.0
  %382 = vmatprep.subr.mxu0 0.0
  %383 = vmatpush1.msra.mxu0 0.0
  %384 = vmatprep.subr.mxu0 0.0
  %385 = vmatpush1.msra.mxu0 0.0
  %386 = vmatprep.subr.mxu0 0.0
  %387 = vmatpush1.msra.mxu0 0.0
  %388 = vmatprep.subr.mxu0 0.0
  %389 = vmatpush1.msra.mxu0 0.0
  %390 = vmatprep.subr.mxu0 0.0
  %391 = vmatpush1.msra.mxu0 0.0
  %392 = vmatprep.subr.mxu0 0.0
  %393 = vmatpush1.msra.mxu0 0.0
  %394 = vmatprep.subr.mxu0 0.0
  %395 = vmatpush1.msra.mxu0 0.0
  %396 = vmatprep.subr.mxu0 0.0
  %397 = vmatpush1.msra.mxu0 0.0
  %398 = vmatprep.subr.mxu0 0.0
  %399 = vmatpush1.msra.mxu0 0.0
  %400 = vmatprep.mubr.f32.mxu0 0.0
  %401 = vmatmul.mubr.f32.gmra.mrb[0].mxu0 %v333
  %v402 = vpop.f32.mrb[0].mxu0
  %v403 = vadd.f32 0.0, %v402
  %v404 = vpop.f32.mrb[0].mxu0
  %405 = vdwg.mxu0
  %v406 = vadd.f32 %v335, %v403
  %v407 = vtanh.pop %v406
  %s408 = scalar_lea.vmem %s0, 40
  %v409 = vld [vmem:[%s408] sm:$0xff]
  %410 = vmatprep.subr.mxu0 0.0
  %411 = vmatpush1.msra.mxu0 %v22
  %412 = vmatprep.subr.mxu0 0.0
  %413 = vmatpush1.msra.mxu0 %v23
  %414 = vmatprep.subr.mxu0 0.0
  %415 = vmatpush1.msra.mxu0 %v24
  %416 = vmatprep.subr.mxu0 0.0
  %417 = vmatpush1.msra.mxu0 %v25
  %418 = vmatprep.subr.mxu0 0.0
  %419 = vmatpush1.msra.mxu0 %v26
  %420 = vmatprep.subr.mxu0 0.0
  %421 = vmatpush1.msra.mxu0 %v27
  %422 = vmatprep.subr.mxu0 0.0
  %423 = vmatpush1.msra.mxu0 %v28
  %424 = vmatprep.subr.mxu0 0.0
  %425 = vmatpush1.msra.mxu0 %v29
  %426 = vmatprep.subr.mxu0 0.0
  %427 = vmatpush1.msra.mxu0 %v30
  %428 = vmatprep.subr.mxu0 0.0
  %429 = vmatpush1.msra.mxu0 %v31
  %430 = vmatprep.subr.mxu0 0.0
  %431 = vmatpush1.msra.mxu0 %v32
  %432 = vmatprep.subr.mxu0 0.0
  %433 = vmatpush1.msra.mxu0 %v33
  %434 = vmatprep.subr.mxu0 0.0
  %435 = vmatpush1.msra.mxu0 %v34
  %436 = vmatprep.subr.mxu0 0.0
  %437 = vmatpush1.msra.mxu0 %v35
  %438 = vmatprep.subr.mxu0 0.0
  %439 = vmatpush1.msra.mxu0 %v36
  %440 = vmatprep.subr.mxu0 0.0
  %441 = vmatpush1.msra.mxu0 %v37
  %442 = vmatprep.subr.mxu0 0.0
  %443 = vmatpush1.msra.mxu0 0.0
  %444 = vmatprep.subr.mxu0 0.0
  %445 = vmatpush1.msra.mxu0 0.0
  %446 = vmatprep.subr.mxu0 0.0
  %447 = vmatpush1.msra.mxu0 0.0
  %448 = vmatprep.subr.mxu0 0.0
  %449 = vmatpush1.msra.mxu0 0.0
  %450 = vmatprep.subr.mxu0 0.0
  %451 = vmatpush1.msra.mxu0 0.0
  %452 = vmatprep.subr.mxu0 0.0
  %453 = vmatpush1.msra.mxu0 0.0
  %454 = vmatprep.subr.mxu0 0.0
  %455 = vmatpush1.msra.mxu0 0.0
  %456 = vmatprep.subr.mxu0 0.0
  %457 = vmatpush1.msra.mxu0 0.0
  %458 = vmatprep.subr.mxu0 0.0
  %459 = vmatpush1.msra.mxu0 0.0
  %460 = vmatprep.subr.mxu0 0.0
  %461 = vmatpush1.msra.mxu0 0.0
  %462 = vmatprep.subr.mxu0 0.0
  %463 = vmatpush1.msra.mxu0 0.0
  %464 = vmatprep.subr.mxu0 0.0
  %465 = vmatpush1.msra.mxu0 0.0
  %466 = vmatprep.subr.mxu0 0.0
  %467 = vmatpush1.msra.mxu0 0.0
  %468 = vmatprep.subr.mxu0 0.0
  %469 = vmatpush1.msra.mxu0 0.0
  %470 = vmatprep.subr.mxu0 0.0
  %471 = vmatpush1.msra.mxu0 0.0
  %472 = vmatprep.subr.mxu0 0.0
  %473 = vmatpush1.msra.mxu0 0.0
  %474 = vmatprep.mubr.f32.mxu0 0.0
  %475 = vmatmul.mubr.f32.gmra.mrb[0].mxu0 %v407
  %v476 = vpop.f32.mrb[0].mxu0
  %v477 = vadd.f32 0.0, %v476
  %v478 = vpop.f32.mrb[0].mxu0
  %479 = vdwg.mxu0
  %v480 = vadd.f32 %v409, %v477
  %v481 = vtanh.pop %v480
  %s482 = scalar_lea.vmem %s0, 48
  %v483 = vld [vmem:[%s482] sm:$0xff]
  %484 = vmatprep.subr.mxu0 0.0
  %485 = vmatpush1.msra.mxu0 %v22
  %486 = vmatprep.subr.mxu0 0.0
  %487 = vmatpush1.msra.mxu0 %v23
  %488 = vmatprep.subr.mxu0 0.0
  %489 = vmatpush1.msra.mxu0 %v24
  %490 = vmatprep.subr.mxu0 0.0
  %491 = vmatpush1.msra.mxu0 %v25
  %492 = vmatprep.subr.mxu0 0.0
  %493 = vmatpush1.msra.mxu0 %v26
  %494 = vmatprep.subr.mxu0 0.0
  %495 = vmatpush1.msra.mxu0 %v27
  %496 = vmatprep.subr.mxu0 0.0
  %497 = vmatpush1.msra.mxu0 %v28
  %498 = vmatprep.subr.mxu0 0.0
  %499 = vmatpush1.msra.mxu0 %v29
  %500 = vmatprep.subr.mxu0 0.0
  %501 = vmatpush1.msra.mxu0 %v30
  %502 = vmatprep.subr.mxu0 0.0
  %503 = vmatpush1.msra.mxu0 %v31
  %504 = vmatprep.subr.mxu0 0.0
  %505 = vmatpush1.msra.mxu0 %v32
  %506 = vmatprep.subr.mxu0 0.0
  %507 = vmatpush1.msra.mxu0 %v33
  %508 = vmatprep.subr.mxu0 0.0
  %509 = vmatpush1.msra.mxu0 %v34
  %510 = vmatprep.subr.mxu0 0.0
  %511 = vmatpush1.msra.mxu0 %v35
  %512 = vmatprep.subr.mxu0 0.0
  %513 = vmatpush1.msra.mxu0 %v36
  %514 = vmatprep.subr.mxu0 0.0
  %515 = vmatpush1.msra.mxu0 %v37
  %516 = vmatprep.subr.mxu0 0.0
  %517 = vmatpush1.msra.mxu0 0.0
  %518 = vmatprep.subr.mxu0 0.0
  %519 = vmatpush1.msra.mxu0 0.0
  %520 = vmatprep.subr.mxu0 0.0
  %521 = vmatpush1.msra.mxu0 0.0
  %522 = vmatprep.subr.mxu0 0.0
  %523 = vmatpush1.msra.mxu0 0.0
  %524 = vmatprep.subr.mxu0 0.0
  %525 = vmatpush1.msra.mxu0 0.0
  %526 = vmatprep.subr.mxu0 0.0
  %527 = vmatpush1.msra.mxu0 0.0
  %528 = vmatprep.subr.mxu0 0.0
  %529 = vmatpush1.msra.mxu0 0.0
  %530 = vmatprep.subr.mxu0 0.0
  %531 = vmatpush1.msra.mxu0 0.0
  %532 = vmatprep.subr.mxu0 0.0
  %533 = vmatpush1.msra.mxu0 0.0
  %534 = vmatprep.subr.mxu0 0.0
  %535 = vmatpush1.msra.mxu0 0.0
  %536 = vmatprep.subr.mxu0 0.0
  %537 = vmatpush1.msra.mxu0 0.0
  %538 = vmatprep.subr.mxu0 0.0
  %539 = vmatpush1.msra.mxu0 0.0
  %540 = vmatprep.subr.mxu0 0.0
  %541 = vmatpush1.msra.mxu0 0.0
  %542 = vmatprep.subr.mxu0 0.0
  %543 = vmatpush1.msra.mxu0 0.0
  %544 = vmatprep.subr.mxu0 0.0
  %545 = vmatpush1.msra.mxu0 0.0
  %546 = vmatprep.subr.mxu0 0.0
  %547 = vmatpush1.msra.mxu0 0.0
  %548 = vmatprep.mubr.f32.mxu0 0.0
  %549 = vmatmul.mubr.f32.gmra.mrb[0].mxu0 %v481
  %v550 = vpop.f32.mrb[0].mxu0
  %v551 = vadd.f32 0.0, %v550
  %v552 = vpop.f32.mrb[0].mxu0
  %553 = vdwg.mxu0
  %v554 = vadd.f32 %v483, %v551
  %v555 = vtanh.pop %v554
  %s556 = scalar_lea.vmem %s0, 56
  %v557 = vld [vmem:[%s556] sm:$0xff]
  %558 = vmatprep.subr.mxu0 0.0
  %559 = vmatpush1.msra.mxu0 %v22
  %560 = vmatprep.subr.mxu0 0.0
  %561 = vmatpush1.msra.mxu0 %v23
  %562 = vmatprep.subr.mxu0 0.0
  %563 = vmatpush1.msra.mxu0 %v24
  %564 = vmatprep.subr.mxu0 0.0
  %565 = vmatpush1.msra.mxu0 %v25
  %566 = vmatprep.subr.mxu0 0.0
  %567 = vmatpush1.msra.mxu0 %v26
  %568 = vmatprep.subr.mxu0 0.0
  %569 = vmatpush1.msra.mxu0 %v27
  %570 = vmatprep.subr.mxu0 0.0
  %571 = vmatpush1.msra.mxu0 %v28
  %572 = vmatprep.subr.mxu0 0.0
  %573 = vmatpush1.msra.mxu0 %v29
  %574 = vmatprep.subr.mxu0 0.0
  %575 = vmatpush1.msra.mxu0 %v30
  %576 = vmatprep.subr.mxu0 0.0
  %577 = vmatpush1.msra.mxu0 %v31
  %578 = vmatprep.subr.mxu0 0.0
  %579 = vmatpush1.msra.mxu0 %v32
  %580 = vmatprep.subr.mxu0 0.0
  %581 = vmatpush1.msra.mxu0 %v33
  %582 = vmatprep.subr.mxu0 0.0
  %583 = vmatpush1.msra.mxu0 %v34
  %584 = vmatprep.subr.mxu0 0.0
  %585 = vmatpush1.msra.mxu0 %v35
  %586 = vmatprep.subr.mxu0 0.0
  %587 = vmatpush1.msra.mxu0 %v36
  %588 = vmatprep.subr.mxu0 0.0
  %589 = vmatpush1.msra.mxu0 %v37
  %590 = vmatprep.subr.mxu0 0.0
  %591 = vmatpush1.msra.mxu0 0.0
  %592 = vmatprep.subr.mxu0 0.0
  %593 = vmatpush1.msra.mxu0 0.0
  %594 = vmatprep.subr.mxu0 0.0
  %595 = vmatpush1.msra.mxu0 0.0
  %596 = vmatprep.subr.mxu0 0.0
  %597 = vmatpush1.msra.mxu0 0.0
  %598 = vmatprep.subr.mxu0 0.0
  %599 = vmatpush1.msra.mxu0 0.0
  %600 = vmatprep.subr.mxu0 0.0
  %601 = vmatpush1.msra.mxu0 0.0
  %602 = vmatprep.subr.mxu0 0.0
  %603 = vmatpush1.msra.mxu0 0.0
  %604 = vmatprep.subr.mxu0 0.0
  %605 = vmatpush1.msra.mxu0 0.0
  %606 = vmatprep.subr.mxu0 0.0
  %607 = vmatpush1.msra.mxu0 0.0
  %608 = vmatprep.subr.mxu0 0.0
  %609 = vmatpush1.msra.mxu0 0.0
  %610 = vmatprep.subr.mxu0 0.0
  %611 = vmatpush1.msra.mxu0 0.0
  %612 = vmatprep.subr.mxu0 0.0
  %613 = vmatpush1.msra.mxu0 0.0
  %614 = vmatprep.subr.mxu0 0.0
  %615 = vmatpush1.msra.mxu0 0.0
  %616 = vmatprep.subr.mxu0 0.0
  %617 = vmatpush1.msra.mxu0 0.0
  %618 = vmatprep.subr.mxu0 0.0
  %619 = vmatpush1.msra.mxu0 0.0
  %620 = vmatprep.subr.mxu0 0.0
  %621 = vmatpush1.msra.mxu0 0.0
  %622 = vmatprep.mubr.f32.mxu0 0.0
  %623 = vmatmul.mubr.f32.gmra.mrb[0].mxu0 %v555
  %v624 = vpop.f32.mrb[0].mxu0
  %v625 = vadd.f32 0.0, %v624
  %v626 = vpop.f32.mrb[0].mxu0
  %627 = vdwg.mxu0
  %v628 = vadd.f32 %v557, %v625
  %v629 = vtanh.pop %v628
  %630 = vst [vmem:[#allocation2] sm:$0xff] %v629
  // Predicated region
  $region22: #{rnn_model_forward.1} parent=0 // pred_check
    %p631 = pneg %p17
  $region23: #{rnn_model_forward.1} parent=0 // pred_check_branch
    %633 = sbr.rel (%p631) target = $region25
  $region24: #{rnn_model_forward.1} parent=0 // pred_region
    %v634 = vld [vmem:[%s2] sm:$0xff]
    %v635 = vld [vmem:[%s2 + $0x8] sm:$0xff]
    %v636 = vld [vmem:[%s2 + $0x10] sm:$0xff]
    %v637 = vld [vmem:[%s2 + $0x18] sm:$0xff]
    %v638 = vld [vmem:[%s2 + $0x20] sm:$0xff]
    %v639 = vld [vmem:[%s2 + $0x28] sm:$0xff]
    %v640 = vld [vmem:[%s2 + $0x30] sm:$0xff]
    %v641 = vld [vmem:[%s2 + $0x38] sm:$0xff]
    %v642 = vld [vmem:[%s2 + $0x40] sm:$0xff]
    %v643 = vld [vmem:[%s2 + $0x48] sm:$0xff]
    %v644 = vld [vmem:[%s2 + $0x50] sm:$0xff]
    %v645 = vld [vmem:[%s2 + $0x58] sm:$0xff]
    %v646 = vld [vmem:[%s2 + $0x60] sm:$0xff]
    %v647 = vld [vmem:[%s2 + $0x68] sm:$0xff]
    %v648 = vld [vmem:[%s2 + $0x70] sm:$0xff]
    %v649 = vld [vmem:[%s2 + $0x78] sm:$0xff]
    %v650 = vld [vmem:[%s3] sm:$0x1]
    %v652 = vlaneseq
    %v653 = vshrl.u32 %v652, 7
    %v654 = vsub.s32 0, %v653
    %v655 = vrot.slane %v650, %v654
    %657 = vmatprep.subr.mxu0 0.0
    %658 = vmatpush1.msra.mxu0 %v634
    %659 = vmatprep.subr.mxu0 0.0
    %660 = vmatpush1.msra.mxu0 %v635
    %661 = vmatprep.subr.mxu0 0.0
    %662 = vmatpush1.msra.mxu0 %v636
    %663 = vmatprep.subr.mxu0 0.0
    %664 = vmatpush1.msra.mxu0 %v637
    %665 = vmatprep.subr.mxu0 0.0
    %666 = vmatpush1.msra.mxu0 %v638
    %667 = vmatprep.subr.mxu0 0.0
    %668 = vmatpush1.msra.mxu0 %v639
    %669 = vmatprep.subr.mxu0 0.0
    %670 = vmatpush1.msra.mxu0 %v640
    %671 = vmatprep.subr.mxu0 0.0
    %672 = vmatpush1.msra.mxu0 %v641
    %673 = vmatprep.subr.mxu0 0.0
    %674 = vmatpush1.msra.mxu0 %v642
    %675 = vmatprep.subr.mxu0 0.0
    %676 = vmatpush1.msra.mxu0 %v643
    %677 = vmatprep.subr.mxu0 0.0
    %678 = vmatpush1.msra.mxu0 %v644
    %679 = vmatprep.subr.mxu0 0.0
    %680 = vmatpush1.msra.mxu0 %v645
    %681 = vmatprep.subr.mxu0 0.0
    %682 = vmatpush1.msra.mxu0 %v646
    %683 = vmatprep.subr.mxu0 0.0
    %684 = vmatpush1.msra.mxu0 %v647
    %685 = vmatprep.subr.mxu0 0.0
    %686 = vmatpush1.msra.mxu0 %v648
    %687 = vmatprep.subr.mxu0 0.0
    %688 = vmatpush1.msra.mxu0 %v649
    %689 = vmatprep.subr.mxu0 0.0
    %690 = vmatpush1.msra.mxu0 0.0
    %691 = vmatprep.subr.mxu0 0.0
    %692 = vmatpush1.msra.mxu0 0.0
    %693 = vmatprep.subr.mxu0 0.0
    %694 = vmatpush1.msra.mxu0 0.0
    %695 = vmatprep.subr.mxu0 0.0
    %696 = vmatpush1.msra.mxu0 0.0
    %697 = vmatprep.subr.mxu0 0.0
    %698 = vmatpush1.msra.mxu0 0.0
    %699 = vmatprep.subr.mxu0 0.0
    %700 = vmatpush1.msra.mxu0 0.0
    %701 = vmatprep.subr.mxu0 0.0
    %702 = vmatpush1.msra.mxu0 0.0
    %703 = vmatprep.subr.mxu0 0.0
    %704 = vmatpush1.msra.mxu0 0.0
    %705 = vmatprep.subr.mxu0 0.0
    %706 = vmatpush1.msra.mxu0 0.0
    %707 = vmatprep.subr.mxu0 0.0
    %708 = vmatpush1.msra.mxu0 0.0
    %709 = vmatprep.subr.mxu0 0.0
    %710 = vmatpush1.msra.mxu0 0.0
    %711 = vmatprep.subr.mxu0 0.0
    %712 = vmatpush1.msra.mxu0 0.0
    %713 = vmatprep.subr.mxu0 0.0
    %714 = vmatpush1.msra.mxu0 0.0
    %715 = vmatprep.subr.mxu0 0.0
    %716 = vmatpush1.msra.mxu0 0.0
    %717 = vmatprep.subr.mxu0 0.0
    %718 = vmatpush1.msra.mxu0 0.0
    %719 = vmatprep.subr.mxu0 0.0
    %720 = vmatpush1.msra.mxu0 0.0
    %721 = vmatprep.mubr.f32.mxu0 0.0
    %722 = vmatmul.mubr.f32.gmra.mrb[0].mxu0 %v629
    %v723 = vpop.f32.mrb[0].mxu0
    %v724 = vadd.f32 %v655, %v723
    %v725 = vpop.f32.mrb[0].mxu0
    %726 = vdwg.mxu0
    %727 = vst [vmem:[%s4] sm:$0xff] %v724
  $region25: #{rnn_model_forward.1} parent=0 // pred_fallthru
    _
  // Predicated region
  $region26: #{rnn_model_forward.1} parent=0 // pred_check
    _
  $region27: #{rnn_model_forward.1} parent=0 // pred_check_branch
    %729 = sbr.rel (0) target = $region29
  $region28: #{rnn_model_forward.1} parent=0 // pred_region
    _
  $region29: #{rnn_model_forward.1} parent=0 // pred_fallthru
    _
  // Predicated region
  $region30: #{rnn_model_forward.1} parent=0 // pred_check
    _
  $region31: #{rnn_model_forward.1} parent=0 // pred_check_branch
    %731 = sbr.rel (0) target = $region33
  $region32: #{rnn_model_forward.1} parent=0 // pred_region
    _
  $region33: #{rnn_model_forward.1} parent=0 // pred_fallthru
    _

</llo_original>
